<compile_context>
chip_gen: v7x
topology: tpu7x:2x2x1
jax: 0.10.0
libtpu: 0.0.40
codegen_flags: <defaults>
</compile_context>

<pallas_src>
import jax
import jax.numpy as jnp
from jax.experimental import pallas as pl
from jax.experimental.pallas import tpu as pltpu

D_MODEL = 32
D_FF = 64
LN_EPS = 1e-5


def ffn_kernel(x_ref, w1_ref, b1_ref, w2_ref, b2_ref, g_ref, beta_ref, o_ref):
    # x_ref: (tm, d_model) tile of tokens.
    x = x_ref[...]
    if x.dtype != jnp.float32:
        x = x.astype(jnp.float32)

    # Load the small per-feature vectors once (avoid re-broadcasting per op).
    b1 = b1_ref[...]        # (1, d_ff)
    b2 = b2_ref[...]        # (1, d_model)
    g = g_ref[...]          # (1, d_model)
    beta = beta_ref[...]    # (1, d_model)

    # fc1 (1x1 conv == matmul) + ReLU
    h = jnp.dot(x, w1_ref[...], preferred_element_type=jnp.float32) + b1
    h = jnp.maximum(h, 0.0)

    # fc2 + residual
    y = jnp.dot(h, w2_ref[...], preferred_element_type=jnp.float32) + (b2 + x)

    # LayerNorm over the last dim (d_model), all in f32.
    mean = jnp.mean(y, axis=-1, keepdims=True)
    var = jnp.mean(jnp.square(y - mean), axis=-1, keepdims=True)
    y_norm = (y - mean) * jax.lax.rsqrt(var + LN_EPS)
    o_ref[...] = (y_norm * g + beta).astype(o_ref.dtype)


def position_ffn(x, w1, b1, w2, b2, gamma, beta, *, tm=512):
    """x: [B, S, d_model].  Returns [B, S, d_model].

    tm: row tile (tokens per grid step).  Default 512 is a multiple of both 128
    (v5e MXU) and 256 (v6e/v7x MXU).  It is clamped (8-aligned) for tiny inputs
    and ragged row counts are padded up to a tile multiple.
    """
    B, S, d_model = x.shape
    d_ff = w1.shape[1]
    rows = B * S

    # Clamp the tile for small inputs, keep it a multiple of 8 (sublane).
    tm_eff = min(tm, pl.cdiv(rows, 8) * 8)
    tm_eff = max(tm_eff, 8)
    grid_m = pl.cdiv(rows, tm_eff)
    padded_rows = grid_m * tm_eff

    x2 = x.reshape(rows, d_model)
    if padded_rows != rows:
        x2 = jnp.pad(x2, ((0, padded_rows - rows), (0, 0)))

    b1_ = b1.reshape(1, d_ff)
    b2_ = b2.reshape(1, d_model)
    g_ = gamma.reshape(1, d_model)
    be_ = beta.reshape(1, d_model)

    out = pl.pallas_call(
        ffn_kernel,
        out_shape=jax.ShapeDtypeStruct((padded_rows, d_model), x.dtype),
        grid=(grid_m,),
        in_specs=[
            pl.BlockSpec((tm_eff, d_model), lambda i: (i, 0)),   # x tile
            pl.BlockSpec((d_model, d_ff), lambda i: (0, 0)),     # W1 (full)
            pl.BlockSpec((1, d_ff), lambda i: (0, 0)),           # b1
            pl.BlockSpec((d_ff, d_model), lambda i: (0, 0)),     # W2 (full)
            pl.BlockSpec((1, d_model), lambda i: (0, 0)),        # b2
            pl.BlockSpec((1, d_model), lambda i: (0, 0)),        # ln gamma
            pl.BlockSpec((1, d_model), lambda i: (0, 0)),        # ln beta
        ],
        out_specs=pl.BlockSpec((tm_eff, d_model), lambda i: (i, 0)),
        compiler_params=pltpu.CompilerParams(
            dimension_semantics=("parallel",)),
    )(x2, w1, b1_, w2, b2_, g_, be_)

    if padded_rows != rows:
        out = out[:rows]
    return out.reshape(B, S, d_model)


def position_ffn_ref(x, w1, b1, w2, b2, gamma, beta):
    h = jnp.maximum(jnp.einsum("bsd,df->bsf", x, w1) + b1, 0.0)
    y = jnp.einsum("bsf,fd->bsd", h, w2) + b2 + x
    mean = jnp.mean(y, axis=-1, keepdims=True)
    var = jnp.mean(jnp.square(y - mean), axis=-1, keepdims=True)
    return (y - mean) * jax.lax.rsqrt(var + LN_EPS) * gamma + beta


if __name__ == "__main__":
    key = jax.random.PRNGKey(0)
    kx, k1, kb1, k2, kb2 = jax.random.split(key, 5)

    B, S = 2, 8
    x = jax.random.normal(kx, (B, S, D_MODEL), dtype=jnp.float32)

    # Deterministic synthetic parameters (Conv1d(k=1) weights as [in, out]).
    w1 = jax.random.normal(k1, (D_MODEL, D_FF), dtype=jnp.float32) * 0.1
    b1 = jax.random.normal(kb1, (D_FF,), dtype=jnp.float32) * 0.1
    w2 = jax.random.normal(k2, (D_FF, D_MODEL), dtype=jnp.float32) * 0.1
    b2 = jax.random.normal(kb2, (D_MODEL,), dtype=jnp.float32) * 0.1
    gamma = jnp.ones((D_MODEL,), dtype=jnp.float32)   # nn.LayerNorm default init
    beta = jnp.zeros((D_MODEL,), dtype=jnp.float32)

    out = position_ffn(x, w1, b1, w2, b2, gamma, beta)
    out = jax.block_until_ready(out)

    ref = position_ffn_ref(x, w1, b1, w2, b2, gamma, beta)
    assert out.shape == (B, S, D_MODEL)
    assert jnp.allclose(out, ref, atol=1e-5, rtol=1e-5), "mismatch vs reference"

    # Also exercise a large, ragged token count to validate the padded path
    # with the performance-sized tile (tm=512).
    B2, S2 = 3, 333  # rows = 999, not a multiple of 512
    x_big = jax.random.normal(kx, (B2, S2, D_MODEL), dtype=jnp.float32)
    out_big = jax.block_until_ready(
        position_ffn(x_big, w1, b1, w2, b2, gamma, beta))
    ref_big = position_ffn_ref(x_big, w1, b1, w2, b2, gamma, beta)
    assert out_big.shape == (B2, S2, D_MODEL)
    assert jnp.allclose(out_big, ref_big, atol=1e-5, rtol=1e-5), "mismatch (big)"

    print("KERNEL_OK")
</pallas_src>

<mosaic_0001>
module attributes {stable_mosaic.version = 11 : i64} {
  func.func @ffn_kernel(%arg0: i32, %arg1: memref<16x32xf32, #tpu.memory_space<vmem>>, %arg2: memref<32x64xf32, #tpu.memory_space<vmem>>, %arg3: memref<1x64xf32, #tpu.memory_space<vmem>>, %arg4: memref<64x32xf32, #tpu.memory_space<vmem>>, %arg5: memref<1x32xf32, #tpu.memory_space<vmem>>, %arg6: memref<1x32xf32, #tpu.memory_space<vmem>>, %arg7: memref<1x32xf32, #tpu.memory_space<vmem>>, %arg8: memref<16x32xf32, #tpu.memory_space<vmem>>) attributes {dimension_semantics = [#tpu.dimension_semantics<parallel>], iteration_bounds = array<i64: 1>, scalar_prefetch = 0 : i64, scratch_operands = 0 : i64, tpu.core_type = #tpu.core_type<tc>, window_params = [{transform_indices = @transform_0, window_bounds = array<i64: 16, 32>}, {pipeline_mode = #tpu.pipeline_mode<synchronous>, transform_indices = @transform_1, window_bounds = array<i64: 32, 64>}, {pipeline_mode = #tpu.pipeline_mode<synchronous>, transform_indices = @transform_2, window_bounds = array<i64: 1, 64>}, {pipeline_mode = #tpu.pipeline_mode<synchronous>, transform_indices = @transform_3, window_bounds = array<i64: 64, 32>}, {pipeline_mode = #tpu.pipeline_mode<synchronous>, transform_indices = @transform_4, window_bounds = array<i64: 1, 32>}, {pipeline_mode = #tpu.pipeline_mode<synchronous>, transform_indices = @transform_5, window_bounds = array<i64: 1, 32>}, {pipeline_mode = #tpu.pipeline_mode<synchronous>, transform_indices = @transform_6, window_bounds = array<i64: 1, 32>}, {transform_indices = @transform_7, window_bounds = array<i64: 16, 32>}]} {
    %c0 = arith.constant 0 : index
    %c0_0 = arith.constant 0 : index
    %0 = vector.load %arg1[%c0, %c0_0] : memref<16x32xf32, #tpu.memory_space<vmem>>, vector<16x32xf32>
    %c0_1 = arith.constant 0 : index
    %c0_2 = arith.constant 0 : index
    %1 = vector.load %arg3[%c0_1, %c0_2] : memref<1x64xf32, #tpu.memory_space<vmem>>, vector<1x64xf32>
    %c0_3 = arith.constant 0 : index
    %c0_4 = arith.constant 0 : index
    %2 = vector.load %arg5[%c0_3, %c0_4] : memref<1x32xf32, #tpu.memory_space<vmem>>, vector<1x32xf32>
    %c0_5 = arith.constant 0 : index
    %c0_6 = arith.constant 0 : index
    %3 = vector.load %arg6[%c0_5, %c0_6] : memref<1x32xf32, #tpu.memory_space<vmem>>, vector<1x32xf32>
    %c0_7 = arith.constant 0 : index
    %c0_8 = arith.constant 0 : index
    %4 = vector.load %arg7[%c0_7, %c0_8] : memref<1x32xf32, #tpu.memory_space<vmem>>, vector<1x32xf32>
    %c0_9 = arith.constant 0 : index
    %c0_10 = arith.constant 0 : index
    %5 = vector.load %arg2[%c0_9, %c0_10] : memref<32x64xf32, #tpu.memory_space<vmem>>, vector<32x64xf32>
    %cst = arith.constant dense<0.000000e+00> : vector<16x64xf32>
    %6 = tpu.matmul %0, %5, %cst {dimension_numbers = #tpu.dot_dimension_numbers<[1], [0], [0], [1], [0, 0, 1, 1], [], []>} : vector<16x32xf32>, vector<32x64xf32>, vector<16x64xf32> -> vector<16x64xf32>
    %7 = vector.broadcast %1 : vector<1x64xf32> to vector<16x64xf32>
    %8 = arith.addf %6, %7 : vector<16x64xf32>
    %cst_11 = arith.constant 0.000000e+00 : f32
    %9 = vector.broadcast %cst_11 : f32 to vector<16x64xf32>
    %10 = arith.maximumf %8, %9 : vector<16x64xf32>
    %c0_12 = arith.constant 0 : index
    %c0_13 = arith.constant 0 : index
    %11 = vector.load %arg4[%c0_12, %c0_13] : memref<64x32xf32, #tpu.memory_space<vmem>>, vector<64x32xf32>
    %cst_14 = arith.constant dense<0.000000e+00> : vector<16x32xf32>
    %12 = tpu.matmul %10, %11, %cst_14 {dimension_numbers = #tpu.dot_dimension_numbers<[1], [0], [0], [1], [0, 0, 1, 1], [], []>} : vector<16x64xf32>, vector<64x32xf32>, vector<16x32xf32> -> vector<16x32xf32>
    %13 = vector.broadcast %2 : vector<1x32xf32> to vector<16x32xf32>
    %14 = arith.addf %13, %0 : vector<16x32xf32>
    %15 = arith.addf %12, %14 : vector<16x32xf32>
    %cst_15 = arith.constant dense<0.000000e+00> : vector<16xf32>
    %16 = vector.multi_reduction <add>, %15, %cst_15 [1] : vector<16x32xf32> to vector<16xf32>
    %17 = vector.shape_cast %16 : vector<16xf32> to vector<16x1xf32>
    %cst_16 = arith.constant 3.200000e+01 : f32
    %18 = vector.broadcast %cst_16 : f32 to vector<16x1xf32>
    %19 = arith.divf %17, %18 : vector<16x1xf32>
    %20 = vector.broadcast %19 : vector<16x1xf32> to vector<16x32xf32>
    %21 = arith.subf %15, %20 : vector<16x32xf32>
    %22 = arith.mulf %21, %21 : vector<16x32xf32>
    %cst_17 = arith.constant dense<0.000000e+00> : vector<16xf32>
    %23 = vector.multi_reduction <add>, %22, %cst_17 [1] : vector<16x32xf32> to vector<16xf32>
    %24 = vector.shape_cast %23 : vector<16xf32> to vector<16x1xf32>
    %cst_18 = arith.constant 3.200000e+01 : f32
    %25 = vector.broadcast %cst_18 : f32 to vector<16x1xf32>
    %26 = arith.divf %24, %25 : vector<16x1xf32>
    %27 = vector.broadcast %19 : vector<16x1xf32> to vector<16x32xf32>
    %28 = arith.subf %15, %27 : vector<16x32xf32>
    %cst_19 = arith.constant 9.99999974E-6 : f32
    %29 = vector.broadcast %cst_19 : f32 to vector<16x1xf32>
    %30 = arith.addf %26, %29 : vector<16x1xf32>
    %31 = math.rsqrt %30 : vector<16x1xf32>
    %32 = vector.broadcast %31 : vector<16x1xf32> to vector<16x32xf32>
    %33 = arith.mulf %28, %32 : vector<16x32xf32>
    %34 = vector.broadcast %3 : vector<1x32xf32> to vector<16x32xf32>
    %35 = arith.mulf %33, %34 : vector<16x32xf32>
    %36 = vector.broadcast %4 : vector<1x32xf32> to vector<16x32xf32>
    %37 = arith.addf %35, %36 : vector<16x32xf32>
    %c0_20 = arith.constant 0 : index
    %c0_21 = arith.constant 0 : index
    %38 = vector.load %arg8[%c0_20, %c0_21] : memref<16x32xf32, #tpu.memory_space<vmem>>, vector<16x32xf32>
    tpu.vector_store %arg8[%c0_20, %c0_21], %37 {strides = array<i32>} : memref<16x32xf32, #tpu.memory_space<vmem>>, vector<16x32xf32>,
    return
  }
  func.func @transform_0(%arg0: i32) -> (i32, i32) {
    %c0_i32 = arith.constant 0 : i32
    %c0_i32_0 = arith.constant 0 : i32
    return %arg0, %c0_i32 : i32, i32
  }
  func.func @transform_1(%arg0: i32) -> (i32, i32) {
    %c0_i32 = arith.constant 0 : i32
    %c0_i32_0 = arith.constant 0 : i32
    %c0_i32_1 = arith.constant 0 : i32
    return %c0_i32, %c0_i32_0 : i32, i32
  }
  func.func @transform_2(%arg0: i32) -> (i32, i32) {
    %c0_i32 = arith.constant 0 : i32
    %c0_i32_0 = arith.constant 0 : i32
    %c0_i32_1 = arith.constant 0 : i32
    return %c0_i32, %c0_i32_0 : i32, i32
  }
  func.func @transform_3(%arg0: i32) -> (i32, i32) {
    %c0_i32 = arith.constant 0 : i32
    %c0_i32_0 = arith.constant 0 : i32
    %c0_i32_1 = arith.constant 0 : i32
    return %c0_i32, %c0_i32_0 : i32, i32
  }
  func.func @transform_4(%arg0: i32) -> (i32, i32) {
    %c0_i32 = arith.constant 0 : i32
    %c0_i32_0 = arith.constant 0 : i32
    %c0_i32_1 = arith.constant 0 : i32
    return %c0_i32, %c0_i32_0 : i32, i32
  }
  func.func @transform_5(%arg0: i32) -> (i32, i32) {
    %c0_i32 = arith.constant 0 : i32
    %c0_i32_0 = arith.constant 0 : i32
    %c0_i32_1 = arith.constant 0 : i32
    return %c0_i32, %c0_i32_0 : i32, i32
  }
  func.func @transform_6(%arg0: i32) -> (i32, i32) {
    %c0_i32 = arith.constant 0 : i32
    %c0_i32_0 = arith.constant 0 : i32
    %c0_i32_1 = arith.constant 0 : i32
    return %c0_i32, %c0_i32_0 : i32, i32
  }
  func.func @transform_7(%arg0: i32) -> (i32, i32) {
    %c0_i32 = arith.constant 0 : i32
    %c0_i32_0 = arith.constant 0 : i32
    return %arg0, %c0_i32 : i32, i32
  }
}

</mosaic_0001>

<llo_original>
// kernel: tpu_custom_call.1
$region0: #{tpu_custom_call.1}
  #allocation0 [shape = 'u32[]', space=smem, size = 0x4, offset = 0x4, fixed_abs, tag = 'smem constant byte address 0x4 - core index']
  #allocation1 [shape = 'u32[144,128]{1,0:T(1,128)}', space=vmem, size = 0x12000, scoped, tag = 'internal scratch']
  %s0 = inlined_call_operand.vmem [shape: f32[16,32], index: 0, kind: input, shape index: {}]
  %s1 = inlined_call_operand.vmem [shape: f32[32,64], index: 1, kind: input, shape index: {}]
  %s2 = inlined_call_operand.vmem [shape: f32[1,64], index: 2, kind: input, shape index: {}]
  %s3 = inlined_call_operand.vmem [shape: f32[64,32], index: 3, kind: input, shape index: {}]
  %s4 = inlined_call_operand.vmem [shape: f32[1,32], index: 4, kind: input, shape index: {}]
  %s5 = inlined_call_operand.vmem [shape: f32[1,32], index: 5, kind: input, shape index: {}]
  %s6 = inlined_call_operand.vmem [shape: f32[1,32], index: 6, kind: input, shape index: {}]
  %s7 = inlined_call_operand.hbm [shape: f32[16,32], index: 7, kind: output, shape index: {}]
  %s8 = sld [smem:[#allocation0]]
  $region38: #{tpu_custom_call.1} parent=0
    _
  %s10 = ssub.s32 1, %s8
  %s11 = scalar_select 0, %s10, %s8
  $region1: #{tpu_custom_call.1} parent=0
    #allocation2 [shape = 'u8[8192]{0}', space=vmem, size = 0x2000, scoped, tag = 'output window, operand 0, single buffered']
    #allocation3 [shape = 's32[1]{0}', space=sflag, size = 0x4, scoped, tag = 'scoped memory for tpu_custom_call.1']
    %12 = vsyncpa [#allocation3], 0
    // Predicated region
    $region2: #{tpu_custom_call.1} parent=1 // pred_check
      _
    $region3: #{tpu_custom_call.1} parent=1 // pred_check_branch
      %14 = sbr.rel (0) target = $region5
    $region4: #{tpu_custom_call.1} parent=1 // pred_region
      _
    $region5: #{tpu_custom_call.1} parent=1 // pred_fallthru
      _
    // Predicated region
    $region6: #{tpu_custom_call.1} parent=1 // pred_check
      _
    $region7: #{tpu_custom_call.1} parent=1 // pred_check_branch
      %16 = sbr.rel (0) target = $region9
    $region8: #{tpu_custom_call.1} parent=1 // pred_region
      _
    $region9: #{tpu_custom_call.1} parent=1 // pred_fallthru
      _
    // Predicated region
    $region10: #{tpu_custom_call.1} parent=1 // pred_check
      _
    $region11: #{tpu_custom_call.1} parent=1 // pred_check_branch
      %18 = sbr.rel (0) target = $region13
    $region12: #{tpu_custom_call.1} parent=1 // pred_region
      _
    $region13: #{tpu_custom_call.1} parent=1 // pred_fallthru
      _
    // Predicated region
    $region14: #{tpu_custom_call.1} parent=1 // pred_check
      _
    $region15: #{tpu_custom_call.1} parent=1 // pred_check_branch
      %20 = sbr.rel (0) target = $region17
    $region16: #{tpu_custom_call.1} parent=1 // pred_region
      _
    $region17: #{tpu_custom_call.1} parent=1 // pred_fallthru
      _
    // Predicated region
    $region18: #{tpu_custom_call.1} parent=1 // pred_check
      _
    $region19: #{tpu_custom_call.1} parent=1 // pred_check_branch
      %22 = sbr.rel (0) target = $region21
    $region20: #{tpu_custom_call.1} parent=1 // pred_region
      _
    $region21: #{tpu_custom_call.1} parent=1 // pred_fallthru
      _
    // Predicated region
    $region22: #{tpu_custom_call.1} parent=1 // pred_check
      _
    $region23: #{tpu_custom_call.1} parent=1 // pred_check_branch
      %24 = sbr.rel (0) target = $region25
    $region24: #{tpu_custom_call.1} parent=1 // pred_region
      _
    $region25: #{tpu_custom_call.1} parent=1 // pred_fallthru
      _
    // Predicated region
    $region26: #{tpu_custom_call.1} parent=1 // pred_check
      _
    $region27: #{tpu_custom_call.1} parent=1 // pred_check_branch
      %26 = sbr.rel (0) target = $region29
    $region28: #{tpu_custom_call.1} parent=1 // pred_region
      _
    $region29: #{tpu_custom_call.1} parent=1 // pred_fallthru
      _
    %v27 = vld [vmem:[%s0] sm:$0xff]
    %v28 = vld [vmem:[%s0 + $0x8] sm:$0xff]
    %v29 = vld [vmem:[%s2] sm:$0x1]
    %v30 = vld [vmem:[%s4] sm:$0x1]
    %v31 = vld [vmem:[%s5] sm:$0x1]
    %v32 = vld [vmem:[%s6] sm:$0x1]
    %v33 = vld [vmem:[%s1] sm:$0xff]
    %v34 = vld [vmem:[%s1 + $0x8] sm:$0xff]
    %v35 = vld [vmem:[%s1 + $0x10] sm:$0xff]
    %v36 = vld [vmem:[%s1 + $0x18] sm:$0xff]
    %v38 = vlaneseq
    %v39 = vshrl.u32 %v38, 7
    %v40 = vsub.s32 0, %v39
    %v41 = vrot.slane %v29, %v40
    %vm43 = vcmask 261120
    %v45 = vsel %vm43, %v27, 0
    %v48 = vsel %vm43, %v28, 0
    %50 = vmatprep.subr.mxu0 0.0
    %51 = vmatpush1.msra.mxu0 %v33
    %52 = vmatprep.subr.mxu0 0.0
    %53 = vmatpush1.msra.mxu0 %v34
    %54 = vmatprep.subr.mxu0 0.0
    %55 = vmatpush1.msra.mxu0 %v35
    %56 = vmatprep.subr.mxu0 0.0
    %57 = vmatpush1.msra.mxu0 %v36
    %58 = vmatprep.subr.mxu0 0.0
    %59 = vmatpush1.msra.mxu0 0.0
    %60 = vmatprep.subr.mxu0 0.0
    %61 = vmatpush1.msra.mxu0 0.0
    %62 = vmatprep.subr.mxu0 0.0
    %63 = vmatpush1.msra.mxu0 0.0
    %64 = vmatprep.subr.mxu0 0.0
    %65 = vmatpush1.msra.mxu0 0.0
    %66 = vmatprep.subr.mxu0 0.0
    %67 = vmatpush1.msra.mxu0 0.0
    %68 = vmatprep.subr.mxu0 0.0
    %69 = vmatpush1.msra.mxu0 0.0
    %70 = vmatprep.subr.mxu0 0.0
    %71 = vmatpush1.msra.mxu0 0.0
    %72 = vmatprep.subr.mxu0 0.0
    %73 = vmatpush1.msra.mxu0 0.0
    %74 = vmatprep.subr.mxu0 0.0
    %75 = vmatpush1.msra.mxu0 0.0
    %76 = vmatprep.subr.mxu0 0.0
    %77 = vmatpush1.msra.mxu0 0.0
    %78 = vmatprep.subr.mxu0 0.0
    %79 = vmatpush1.msra.mxu0 0.0
    %80 = vmatprep.subr.mxu0 0.0
    %81 = vmatpush1.msra.mxu0 0.0
    %82 = vmatprep.subr.mxu0 0.0
    %83 = vmatpush1.msra.mxu0 0.0
    %84 = vmatprep.subr.mxu0 0.0
    %85 = vmatpush1.msra.mxu0 0.0
    %86 = vmatprep.subr.mxu0 0.0
    %87 = vmatpush1.msra.mxu0 0.0
    %88 = vmatprep.subr.mxu0 0.0
    %89 = vmatpush1.msra.mxu0 0.0
    %90 = vmatprep.subr.mxu0 0.0
    %91 = vmatpush1.msra.mxu0 0.0
    %92 = vmatprep.subr.mxu0 0.0
    %93 = vmatpush1.msra.mxu0 0.0
    %94 = vmatprep.subr.mxu0 0.0
    %95 = vmatpush1.msra.mxu0 0.0
    %96 = vmatprep.subr.mxu0 0.0
    %97 = vmatpush1.msra.mxu0 0.0
    %98 = vmatprep.subr.mxu0 0.0
    %99 = vmatpush1.msra.mxu0 0.0
    %100 = vmatprep.subr.mxu0 0.0
    %101 = vmatpush1.msra.mxu0 0.0
    %102 = vmatprep.subr.mxu0 0.0
    %103 = vmatpush1.msra.mxu0 0.0
    %104 = vmatprep.subr.mxu0 0.0
    %105 = vmatpush1.msra.mxu0 0.0
    %106 = vmatprep.subr.mxu0 0.0
    %107 = vmatpush1.msra.mxu0 0.0
    %108 = vmatprep.subr.mxu0 0.0
    %109 = vmatpush1.msra.mxu0 0.0
    %110 = vmatprep.subr.mxu0 0.0
    %111 = vmatpush1.msra.mxu0 0.0
    %112 = vmatprep.subr.mxu0 0.0
    %113 = vmatpush1.msra.mxu0 0.0
    %114 = vmatprep.mubr.f32.mxu0 0.0
    %115 = vmatmul.mubr.f32.gmra.mrb[0].mxu0 %v45
    %v116 = vpop.f32.mrb[0].mxu0
    %v117 = vadd.f32 %v41, %v116
    %v118 = vpop.f32.mrb[0].mxu0
    %119 = vmatprep.mubr.f32.mxu0 0.0
    %120 = vmatmul.mubr.f32.gmra.mrb[0].mxu0 %v48
    %v121 = vpop.f32.mrb[0].mxu0
    %v122 = vadd.f32 %v41, %v121
    %v123 = vpop.f32.mrb[0].mxu0
    %124 = vdwg.mxu0
    %v125 = vmax.f32 %v117, 0.0
    %v126 = vmax.f32 %v122, 0.0
    %v127 = vld [vmem:[%s3] sm:$0xff]
    %v128 = vld [vmem:[%s3 + $0x8] sm:$0xff]
    %v129 = vld [vmem:[%s3 + $0x10] sm:$0xff]
    %v130 = vld [vmem:[%s3 + $0x18] sm:$0xff]
    %v131 = vld [vmem:[%s3 + $0x20] sm:$0xff]
    %v132 = vld [vmem:[%s3 + $0x28] sm:$0xff]
    %v133 = vld [vmem:[%s3 + $0x30] sm:$0xff]
    %v134 = vld [vmem:[%s3 + $0x38] sm:$0xff]
    %v136 = vlaneseq
    %v137 = vshrl.u32 %v136, 7
    %v138 = vsub.s32 0, %v137
    %v139 = vrot.slane %v30, %v138
    %v141 = vadd.f32 %v139, %v27
    %v142 = vadd.f32 %v139, %v28
    %vm143 = vcmask 523264
    %v145 = vsel %vm143, %v125, 0
    %v148 = vsel %vm143, %v126, 0
    %150 = vmatprep.subr.mxu0 0.0
    %151 = vmatpush1.msra.mxu0 %v127
    %152 = vmatprep.subr.mxu0 0.0
    %153 = vmatpush1.msra.mxu0 %v128
    %154 = vmatprep.subr.mxu0 0.0
    %155 = vmatpush1.msra.mxu0 %v129
    %156 = vmatprep.subr.mxu0 0.0
    %157 = vmatpush1.msra.mxu0 %v130
    %158 = vmatprep.subr.mxu0 0.0
    %159 = vmatpush1.msra.mxu0 %v131
    %160 = vmatprep.subr.mxu0 0.0
    %161 = vmatpush1.msra.mxu0 %v132
    %162 = vmatprep.subr.mxu0 0.0
    %163 = vmatpush1.msra.mxu0 %v133
    %164 = vmatprep.subr.mxu0 0.0
    %165 = vmatpush1.msra.mxu0 %v134
    %166 = vmatprep.subr.mxu0 0.0
    %167 = vmatpush1.msra.mxu0 0.0
    %168 = vmatprep.subr.mxu0 0.0
    %169 = vmatpush1.msra.mxu0 0.0
    %170 = vmatprep.subr.mxu0 0.0
    %171 = vmatpush1.msra.mxu0 0.0
    %172 = vmatprep.subr.mxu0 0.0
    %173 = vmatpush1.msra.mxu0 0.0
    %174 = vmatprep.subr.mxu0 0.0
    %175 = vmatpush1.msra.mxu0 0.0
    %176 = vmatprep.subr.mxu0 0.0
    %177 = vmatpush1.msra.mxu0 0.0
    %178 = vmatprep.subr.mxu0 0.0
    %179 = vmatpush1.msra.mxu0 0.0
    %180 = vmatprep.subr.mxu0 0.0
    %181 = vmatpush1.msra.mxu0 0.0
    %182 = vmatprep.subr.mxu0 0.0
    %183 = vmatpush1.msra.mxu0 0.0
    %184 = vmatprep.subr.mxu0 0.0
    %185 = vmatpush1.msra.mxu0 0.0
    %186 = vmatprep.subr.mxu0 0.0
    %187 = vmatpush1.msra.mxu0 0.0
    %188 = vmatprep.subr.mxu0 0.0
    %189 = vmatpush1.msra.mxu0 0.0
    %190 = vmatprep.subr.mxu0 0.0
    %191 = vmatpush1.msra.mxu0 0.0
    %192 = vmatprep.subr.mxu0 0.0
    %193 = vmatpush1.msra.mxu0 0.0
    %194 = vmatprep.subr.mxu0 0.0
    %195 = vmatpush1.msra.mxu0 0.0
    %196 = vmatprep.subr.mxu0 0.0
    %197 = vmatpush1.msra.mxu0 0.0
    %198 = vmatprep.subr.mxu0 0.0
    %199 = vmatpush1.msra.mxu0 0.0
    %200 = vmatprep.subr.mxu0 0.0
    %201 = vmatpush1.msra.mxu0 0.0
    %202 = vmatprep.subr.mxu0 0.0
    %203 = vmatpush1.msra.mxu0 0.0
    %204 = vmatprep.subr.mxu0 0.0
    %205 = vmatpush1.msra.mxu0 0.0
    %206 = vmatprep.subr.mxu0 0.0
    %207 = vmatpush1.msra.mxu0 0.0
    %208 = vmatprep.subr.mxu0 0.0
    %209 = vmatpush1.msra.mxu0 0.0
    %210 = vmatprep.subr.mxu0 0.0
    %211 = vmatpush1.msra.mxu0 0.0
    %212 = vmatprep.subr.mxu0 0.0
    %213 = vmatpush1.msra.mxu0 0.0
    %214 = vmatprep.mubr.f32.mxu0 0.0
    %215 = vmatmul.mubr.f32.gmra.mrb[0].mxu0 %v145
    %v216 = vpop.f32.mrb[0].mxu0
    %v217 = vadd.f32 %v141, %v216
    %v218 = vpop.f32.mrb[0].mxu0
    %219 = vmatprep.mubr.f32.mxu0 0.0
    %220 = vmatmul.mubr.f32.gmra.mrb[0].mxu0 %v148
    %v221 = vpop.f32.mrb[0].mxu0
    %v222 = vadd.f32 %v142, %v221
    %v223 = vpop.f32.mrb[0].mxu0
    %224 = vdwg.mxu0
    %v225 = vsel %vm43, %v217, 0.0
    %226 = vadd.xlane.f32.xlu0 %v225
    %v227 = vpop.xlane.xlu0 %226
    %v228 = vsel %vm43, %v222, 0.0
    %229 = vadd.xlane.f32.xlu0 %v228
    %v230 = vpop.xlane.xlu0 %229
    %v231 = vrcp.pop 32.0
    %v232 = vmul.f32 %v227, %v231
    %v233 = vmul.f32 %v230, %v231
    %v234 = vsub.f32 %v217, %v232
    %v235 = vsub.f32 %v222, %v233
    %v236 = vmul.f32 %v234, %v234
    %v237 = vmul.f32 %v235, %v235
    %v238 = vsel %vm43, %v236, 0.0
    %239 = vadd.xlane.f32.xlu0 %v238
    %v240 = vpop.xlane.xlu0 %239
    %v241 = vsel %vm43, %v237, 0.0
    %242 = vadd.xlane.f32.xlu0 %v241
    %v243 = vpop.xlane.xlu0 %242
    %v244 = vmul.f32 %v240, %v231
    %v245 = vmul.f32 %v243, %v231
    %v246 = vadd.f32 %v244, 1e-05
    %v247 = vadd.f32 %v245, 1e-05
    %v248 = vrsqrt.pop %v246
    %v249 = vrsqrt.pop %v247
    %v250 = vmul.f32 %v234, %v248
    %v251 = vmul.f32 %v235, %v249
    %v253 = vlaneseq
    %v254 = vshrl.u32 %v253, 7
    %v255 = vsub.s32 0, %v254
    %v256 = vrot.slane %v31, %v255
    %v258 = vmul.f32 %v250, %v256
    %v259 = vmul.f32 %v251, %v256
    %v261 = vlaneseq
    %v262 = vshrl.u32 %v261, 7
    %v263 = vsub.s32 0, %v262
    %v264 = vrot.slane %v32, %v263
    %v266 = vadd.f32 %v258, %v264
    %v267 = vadd.f32 %v259, %v264
    %268 = vst.msk [vmem:[#allocation2] sm:$0xff] %vm43, %v266
    %269 = vst.msk [vmem:[#allocation2 + $0x8] sm:$0xff] %vm43, %v267
    // Predicated region
    $region30: #{tpu_custom_call.1} parent=1 // pred_check
      _
    $region31: #{tpu_custom_call.1} parent=1 // pred_check_branch
      %271 = sbr.rel (0) target = $region33
    $region32: #{tpu_custom_call.1} parent=1 // pred_region
      %s273 = ssub.s32 256, 256
      %274 = vsyncadd [#allocation3], %s273
      %s275 = sshll.u32 [#allocation2], 4
      %s276 = int_to_ptr.vmem [resolvable:$true] %s275
      %281 = dma.vmem_to_hbm [thread:$0]  %s276, 256, %s7, [#allocation3], 128, 128, 8
    $region33: #{tpu_custom_call.1} parent=1 // pred_fallthru
      _
    // Predicated region
    $region34: #{tpu_custom_call.1} parent=1 // pred_check
      _
    $region35: #{tpu_custom_call.1} parent=1 // pred_check_branch
      %283 = sbr.rel (0) target = $region37
    $region36: #{tpu_custom_call.1} parent=1 // pred_region
      %284 = dma.done [#allocation3], 256
    $region37: #{tpu_custom_call.1} parent=1 // pred_fallthru
      _
    %285 = vsyncpa [#allocation3], 1

</llo_original>
